<compile_context>
chip_gen: v5e
topology: v5e:2x2
jax: 0.10.0
libtpu: 0.0.40
codegen_flags: <defaults>
</compile_context>

<pallas_src>
import functools

import jax
import jax.numpy as jnp
from jax.experimental import pallas as pl
from jax.experimental.pallas import tpu as pltpu

H1_REAL, H2_REAL = 400, 300
H1_PAD, H2_PAD = 512, 384          # lane-aligned hidden widths (multiples of 128)


def _round_up(x, m):
    return ((x + m - 1) // m) * m


def _epilogue_dtype():
    """bf16 bias/ReLU epilogue only where the VPU is bf16-native (v6e / v7x)."""
    try:
        kind = jax.devices()[0].device_kind.lower()
    except Exception:
        kind = ""
    if any(tag in kind for tag in ("v6", "6e", "v7", "7x")):
        return jnp.bfloat16
    return jnp.float32            # v5e / v5p / v4 / unknown: keep f32 elementwise


def critic_kernel(s_ref, a_ref, w1s_ref, w1a_ref, b1_ref, w2_ref, b2_ref,
                  w3_ref, b3_ref, o_ref, *, edt):
    # Activations tiled on batch; weights/biases are grid-invariant VMEM blocks.
    s = s_ref[...].astype(jnp.bfloat16)
    a = a_ref[...].astype(jnp.bfloat16)

    # Layer 1: concat-free first layer (state @ W1s + action @ W1a), f32 MXU accumulate.
    acc1 = (jnp.dot(s, w1s_ref[...], preferred_element_type=jnp.float32)
            + jnp.dot(a, w1a_ref[...], preferred_element_type=jnp.float32))
    h1 = jnp.maximum(acc1.astype(edt) + b1_ref[...], 0.0)     # bias + ReLU in edt (VPU)

    # Layer 2 (padded 512 -> 384): bf16 operands, f32 accumulation.
    acc2 = jnp.dot(h1.astype(jnp.bfloat16), w2_ref[...],
                   preferred_element_type=jnp.float32)
    h2 = jnp.maximum(acc2.astype(edt) + b2_ref[...], 0.0)

    # Layer 3 (300 -> 1): lane reduction (VPU mul + XLU reduce) instead of an N=1 MXU pass.
    q = (jnp.sum(h2.astype(jnp.float32) * w3_ref[...], axis=-1, keepdims=True)
         + b3_ref[...])
    o_ref[...] = q.astype(o_ref.dtype)


def critic_forward(state, action, kernel_params, *, block_b=256):
    """state: (B, state_dim), action: (B, action_dim) -> q: (B, 1) float32."""
    w1s, w1a, b1, w2, b2, w3, b3 = kernel_params
    B, SD = state.shape
    AD = action.shape[1]
    H1 = w1s.shape[1]
    H2 = w2.shape[1]
    edt = b1.dtype                       # epilogue dtype chosen at packing time

    state = state.astype(jnp.float32)
    action = action.astype(jnp.float32)

    # Batch tiling: no wrapper-side padding.  Aim for >=2 grid steps (v7x megacore,
    # batch axis marked "parallel"), capped at block_b rows/step.  The last block may be
    # partial: Pallas masks its out-of-bounds output writes, and no op mixes batch rows.
    n_steps = max(2, pl.cdiv(B, block_b))
    TB = _round_up(pl.cdiv(B, n_steps), 8)
    grid = (pl.cdiv(B, TB),)

    # Advisory cost model (real, unpadded layer sizes for flops; VMEM traffic ignored).
    flops = 2 * B * ((SD + AD) * H1_REAL + H1_REAL * H2_REAL + H2_REAL)
    bytes_accessed = (state.size * 4 + action.size * 4 + B * 4
                      + (w1s.size + w1a.size + w2.size) * 2
                      + (b1.size + b2.size) * b1.dtype.itemsize
                      + (w3.size + b3.size) * 4)

    inv = lambda i: (0, 0)   # grid-invariant -> weights stay resident in VMEM

    out = pl.pallas_call(
        functools.partial(critic_kernel, edt=edt),
        out_shape=jax.ShapeDtypeStruct((B, 1), jnp.float32),
        grid=grid,
        in_specs=[
            pl.BlockSpec((TB, SD), lambda i: (i, 0)),   # state tile
            pl.BlockSpec((TB, AD), lambda i: (i, 0)),   # action tile
            pl.BlockSpec((SD, H1), inv),                # W1_state  (bf16)
            pl.BlockSpec((AD, H1), inv),                # W1_action (bf16)
            pl.BlockSpec((1, H1), inv),                 # b1 (edt)
            pl.BlockSpec((H1, H2), inv),                # W2 (bf16)
            pl.BlockSpec((1, H2), inv),                 # b2 (edt)
            pl.BlockSpec((1, H2), inv),                 # w3 row (f32)
            pl.BlockSpec((1, 1), inv),                  # b3 (f32)
        ],
        out_specs=pl.BlockSpec((TB, 1), lambda i: (i, 0)),
        compiler_params=pltpu.CompilerParams(
            dimension_semantics=("parallel",)),
        cost_estimate=pl.CostEstimate(flops=flops, transcendentals=0,
                                      bytes_accessed=bytes_accessed),
    )(state, action, w1s, w1a, b1, w2, b2, w3, b3)
    return out


def init_critic_params(key, state_dim, action_dim):
    """PyTorch nn.Linear default init: U(-1/sqrt(fan_in), 1/sqrt(fan_in)).
    Weights stored as (in_features, out_features), at the *real* (unpadded) sizes."""
    in_dim = state_dim + action_dim
    _, kw1, kb1, kw2, kb2, kw3, kb3 = jax.random.split(key, 7)

    def u(k, shape, fan_in):
        bound = 1.0 / float(fan_in) ** 0.5
        return jax.random.uniform(k, shape, jnp.float32, -bound, bound)

    w1 = u(kw1, (in_dim, H1_REAL), in_dim)
    b1 = u(kb1, (1, H1_REAL), in_dim)
    w2 = u(kw2, (H1_REAL, H2_REAL), H1_REAL)
    b2 = u(kb2, (1, H2_REAL), H1_REAL)
    w3 = u(kw3, (H2_REAL, 1), H2_REAL)
    b3 = u(kb3, (1, 1), H2_REAL)
    return (w1, b1, w2, b2, w3, b3)


def pack_params_for_kernel(params, state_dim, epilogue_dtype=jnp.float32):
    """One-time packing: split W1 (no runtime concat), zero-pad hidden dims to 512/384,
    cast matmul weights to bf16 and biases to the epilogue dtype.  Zero padding keeps
    the forward pass exact (padded columns/rows contribute exactly zero)."""
    w1, b1, w2, b2, w3, b3 = params
    in_dim = w1.shape[0]
    action_dim = in_dim - state_dim

    w1s = jnp.zeros((state_dim, H1_PAD), jnp.float32).at[:, :H1_REAL].set(w1[:state_dim])
    w1a = jnp.zeros((action_dim, H1_PAD), jnp.float32).at[:, :H1_REAL].set(w1[state_dim:])
    b1p = jnp.zeros((1, H1_PAD), jnp.float32).at[:, :H1_REAL].set(b1)
    w2p = jnp.zeros((H1_PAD, H2_PAD), jnp.float32).at[:H1_REAL, :H2_REAL].set(w2)
    b2p = jnp.zeros((1, H2_PAD), jnp.float32).at[:, :H2_REAL].set(b2)
    w3p = jnp.zeros((1, H2_PAD), jnp.float32).at[:, :H2_REAL].set(w3[:, 0])

    return (w1s.astype(jnp.bfloat16), w1a.astype(jnp.bfloat16),
            b1p.astype(epilogue_dtype),
            w2p.astype(jnp.bfloat16), b2p.astype(epilogue_dtype),
            w3p, b3.astype(jnp.float32))


def critic_ref_f32(state, action, params):
    """Pure-f32 JAX reference with the original module semantics."""
    w1, b1, w2, b2, w3, b3 = params
    x = jnp.concatenate([state, action], axis=-1)
    h1 = jnp.maximum(x @ w1 + b1, 0.0)
    h2 = jnp.maximum(h1 @ w2 + b2, 0.0)
    return h2 @ w3 + b3


def critic_ref_matched(state, action, kernel_params):
    """Precision-matched reference (same dtype recipe as the kernel)."""
    w1s, w1a, b1, w2, b2, w3, b3 = kernel_params
    edt = b1.dtype
    s = state.astype(jnp.bfloat16)
    a = action.astype(jnp.bfloat16)
    acc1 = (jnp.dot(s, w1s, preferred_element_type=jnp.float32)
            + jnp.dot(a, w1a, preferred_element_type=jnp.float32))
    h1 = jnp.maximum(acc1.astype(edt) + b1, 0.0)
    acc2 = jnp.dot(h1.astype(jnp.bfloat16), w2, preferred_element_type=jnp.float32)
    h2 = jnp.maximum(acc2.astype(edt) + b2, 0.0)
    return jnp.sum(h2.astype(jnp.float32) * w3, axis=-1, keepdims=True) + b3


if __name__ == "__main__":
    # Small shapes consistent with the module: 'kin_target' obs + 'vel' action.
    state_dim = 12
    action_dim = 4
    batch = 12   # exercises >=2 grid steps and a partial (masked) last block

    key = jax.random.PRNGKey(0)
    k_params, k_state, k_action = jax.random.split(key, 3)

    edt = _epilogue_dtype()
    params = init_critic_params(k_params, state_dim, action_dim)
    kparams = pack_params_for_kernel(params, state_dim, epilogue_dtype=edt)

    state = jax.random.normal(k_state, (batch, state_dim), jnp.float32)
    action = jax.random.normal(k_action, (batch, action_dim), jnp.float32)

    q = critic_forward(state, action, kparams)
    q = jax.block_until_ready(q)

    q_match = critic_ref_matched(state, action, kparams)   # same precision recipe
    q_f32 = critic_ref_f32(state, action, params)          # original f32 semantics

    assert q.shape == (batch, 1)
    assert jnp.allclose(q, q_match, atol=1e-2, rtol=1e-2), \
        f"kernel vs matched ref: max|diff|={float(jnp.max(jnp.abs(q - q_match)))}"
    assert jnp.allclose(q, q_f32, atol=5e-2, rtol=5e-2), \
        f"kernel vs f32 ref: max|diff|={float(jnp.max(jnp.abs(q - q_f32)))}"

    print("KERNEL_OK")
</pallas_src>

<mosaic_0001>
module attributes {stable_mosaic.version = 11 : i64} {
  func.func @critic_kernel(%arg0: i32, %arg1: memref<8x12xf32, #tpu.memory_space<vmem>>, %arg2: memref<8x4xf32, #tpu.memory_space<vmem>>, %arg3: memref<12x512xbf16, #tpu.memory_space<vmem>>, %arg4: memref<4x512xbf16, #tpu.memory_space<vmem>>, %arg5: memref<1x512xf32, #tpu.memory_space<vmem>>, %arg6: memref<512x384xbf16, #tpu.memory_space<vmem>>, %arg7: memref<1x384xf32, #tpu.memory_space<vmem>>, %arg8: memref<1x384xf32, #tpu.memory_space<vmem>>, %arg9: memref<1x1xf32, #tpu.memory_space<vmem>>, %arg10: memref<8x1xf32, #tpu.memory_space<vmem>>) attributes {dimension_semantics = [#tpu.dimension_semantics<parallel>], iteration_bounds = array<i64: 2>, scalar_prefetch = 0 : i64, scratch_operands = 0 : i64, tpu.core_type = #tpu.core_type<tc>, window_params = [{transform_indices = @transform_0, window_bounds = array<i64: 8, 12>}, {transform_indices = @transform_1, window_bounds = array<i64: 8, 4>}, {pipeline_mode = #tpu.pipeline_mode<synchronous>, transform_indices = @transform_2, window_bounds = array<i64: 12, 512>}, {pipeline_mode = #tpu.pipeline_mode<synchronous>, transform_indices = @transform_3, window_bounds = array<i64: 4, 512>}, {pipeline_mode = #tpu.pipeline_mode<synchronous>, transform_indices = @transform_4, window_bounds = array<i64: 1, 512>}, {pipeline_mode = #tpu.pipeline_mode<synchronous>, transform_indices = @transform_5, window_bounds = array<i64: 512, 384>}, {pipeline_mode = #tpu.pipeline_mode<synchronous>, transform_indices = @transform_6, window_bounds = array<i64: 1, 384>}, {pipeline_mode = #tpu.pipeline_mode<synchronous>, transform_indices = @transform_7, window_bounds = array<i64: 1, 384>}, {pipeline_mode = #tpu.pipeline_mode<synchronous>, transform_indices = @transform_8, window_bounds = array<i64: 1, 1>}, {transform_indices = @transform_9, window_bounds = array<i64: 8, 1>}]} {
    %c0 = arith.constant 0 : index
    %c0_0 = arith.constant 0 : index
    %0 = vector.load %arg1[%c0, %c0_0] : memref<8x12xf32, #tpu.memory_space<vmem>>, vector<8x12xf32>
    %1 = arith.truncf %0 : vector<8x12xf32> to vector<8x12xbf16>
    %c0_1 = arith.constant 0 : index
    %c0_2 = arith.constant 0 : index
    %2 = vector.load %arg2[%c0_1, %c0_2] : memref<8x4xf32, #tpu.memory_space<vmem>>, vector<8x4xf32>
    %3 = arith.truncf %2 : vector<8x4xf32> to vector<8x4xbf16>
    %c0_3 = arith.constant 0 : index
    %c0_4 = arith.constant 0 : index
    %4 = vector.load %arg3[%c0_3, %c0_4] : memref<12x512xbf16, #tpu.memory_space<vmem>>, vector<12x512xbf16>
    %cst = arith.constant dense<0.000000e+00> : vector<8x512xf32>
    %5 = tpu.matmul %1, %4, %cst {dimension_numbers = #tpu.dot_dimension_numbers<[1], [0], [0], [1], [0, 0, 1, 1], [], []>} : vector<8x12xbf16>, vector<12x512xbf16>, vector<8x512xf32> -> vector<8x512xf32>
    %c0_5 = arith.constant 0 : index
    %c0_6 = arith.constant 0 : index
    %6 = vector.load %arg4[%c0_5, %c0_6] : memref<4x512xbf16, #tpu.memory_space<vmem>>, vector<4x512xbf16>
    %cst_7 = arith.constant dense<0.000000e+00> : vector<8x512xf32>
    %7 = tpu.matmul %3, %6, %cst_7 {dimension_numbers = #tpu.dot_dimension_numbers<[1], [0], [0], [1], [0, 0, 1, 1], [], []>} : vector<8x4xbf16>, vector<4x512xbf16>, vector<8x512xf32> -> vector<8x512xf32>
    %8 = arith.addf %5, %7 : vector<8x512xf32>
    %c0_8 = arith.constant 0 : index
    %c0_9 = arith.constant 0 : index
    %9 = vector.load %arg5[%c0_8, %c0_9] : memref<1x512xf32, #tpu.memory_space<vmem>>, vector<1x512xf32>
    %10 = vector.broadcast %9 : vector<1x512xf32> to vector<8x512xf32>
    %11 = arith.addf %8, %10 : vector<8x512xf32>
    %cst_10 = arith.constant 0.000000e+00 : f32
    %12 = vector.broadcast %cst_10 : f32 to vector<8x512xf32>
    %13 = arith.maximumf %11, %12 : vector<8x512xf32>
    %14 = arith.truncf %13 : vector<8x512xf32> to vector<8x512xbf16>
    %c0_11 = arith.constant 0 : index
    %c0_12 = arith.constant 0 : index
    %15 = vector.load %arg6[%c0_11, %c0_12] : memref<512x384xbf16, #tpu.memory_space<vmem>>, vector<512x384xbf16>
    %cst_13 = arith.constant dense<0.000000e+00> : vector<8x384xf32>
    %16 = tpu.matmul %14, %15, %cst_13 {dimension_numbers = #tpu.dot_dimension_numbers<[1], [0], [0], [1], [0, 0, 1, 1], [], []>} : vector<8x512xbf16>, vector<512x384xbf16>, vector<8x384xf32> -> vector<8x384xf32>
    %c0_14 = arith.constant 0 : index
    %c0_15 = arith.constant 0 : index
    %17 = vector.load %arg7[%c0_14, %c0_15] : memref<1x384xf32, #tpu.memory_space<vmem>>, vector<1x384xf32>
    %18 = vector.broadcast %17 : vector<1x384xf32> to vector<8x384xf32>
    %19 = arith.addf %16, %18 : vector<8x384xf32>
    %cst_16 = arith.constant 0.000000e+00 : f32
    %20 = vector.broadcast %cst_16 : f32 to vector<8x384xf32>
    %21 = arith.maximumf %19, %20 : vector<8x384xf32>
    %c0_17 = arith.constant 0 : index
    %c0_18 = arith.constant 0 : index
    %22 = vector.load %arg8[%c0_17, %c0_18] : memref<1x384xf32, #tpu.memory_space<vmem>>, vector<1x384xf32>
    %23 = vector.broadcast %22 : vector<1x384xf32> to vector<8x384xf32>
    %24 = arith.mulf %21, %23 : vector<8x384xf32>
    %cst_19 = arith.constant dense<0.000000e+00> : vector<8xf32>
    %25 = vector.multi_reduction <add>, %24, %cst_19 [1] : vector<8x384xf32> to vector<8xf32>
    %26 = vector.shape_cast %25 : vector<8xf32> to vector<8x1xf32>
    %c0_20 = arith.constant 0 : index
    %c0_21 = arith.constant 0 : index
    %27 = vector.load %arg9[%c0_20, %c0_21] : memref<1x1xf32, #tpu.memory_space<vmem>>, vector<1x1xf32>
    %28 = vector.broadcast %27 : vector<1x1xf32> to vector<8x1xf32>
    %29 = arith.addf %26, %28 : vector<8x1xf32>
    %c0_22 = arith.constant 0 : index
    %c0_23 = arith.constant 0 : index
    %30 = vector.load %arg10[%c0_22, %c0_23] : memref<8x1xf32, #tpu.memory_space<vmem>>, vector<8x1xf32>
    tpu.vector_store %arg10[%c0_22, %c0_23], %29 {strides = array<i32>} : memref<8x1xf32, #tpu.memory_space<vmem>>, vector<8x1xf32>,
    return
  }
  func.func @transform_0(%arg0: i32) -> (i32, i32) {
    %c0_i32 = arith.constant 0 : i32
    %c0_i32_0 = arith.constant 0 : i32
    return %arg0, %c0_i32 : i32, i32
  }
  func.func @transform_1(%arg0: i32) -> (i32, i32) {
    %c0_i32 = arith.constant 0 : i32
    %c0_i32_0 = arith.constant 0 : i32
    return %arg0, %c0_i32 : i32, i32
  }
  func.func @transform_2(%arg0: i32) -> (i32, i32) {
    %c0_i32 = arith.constant 0 : i32
    %c0_i32_0 = arith.constant 0 : i32
    %c0_i32_1 = arith.constant 0 : i32
    return %c0_i32, %c0_i32_0 : i32, i32
  }
  func.func @transform_3(%arg0: i32) -> (i32, i32) {
    %c0_i32 = arith.constant 0 : i32
    %c0_i32_0 = arith.constant 0 : i32
    %c0_i32_1 = arith.constant 0 : i32
    return %c0_i32, %c0_i32_0 : i32, i32
  }
  func.func @transform_4(%arg0: i32) -> (i32, i32) {
    %c0_i32 = arith.constant 0 : i32
    %c0_i32_0 = arith.constant 0 : i32
    %c0_i32_1 = arith.constant 0 : i32
    return %c0_i32, %c0_i32_0 : i32, i32
  }
  func.func @transform_5(%arg0: i32) -> (i32, i32) {
    %c0_i32 = arith.constant 0 : i32
    %c0_i32_0 = arith.constant 0 : i32
    %c0_i32_1 = arith.constant 0 : i32
    return %c0_i32, %c0_i32_0 : i32, i32
  }
  func.func @transform_6(%arg0: i32) -> (i32, i32) {
    %c0_i32 = arith.constant 0 : i32
    %c0_i32_0 = arith.constant 0 : i32
    %c0_i32_1 = arith.constant 0 : i32
    return %c0_i32, %c0_i32_0 : i32, i32
  }
  func.func @transform_7(%arg0: i32) -> (i32, i32) {
    %c0_i32 = arith.constant 0 : i32
    %c0_i32_0 = arith.constant 0 : i32
    %c0_i32_1 = arith.constant 0 : i32
    return %c0_i32, %c0_i32_0 : i32, i32
  }
  func.func @transform_8(%arg0: i32) -> (i32, i32) {
    %c0_i32 = arith.constant 0 : i32
    %c0_i32_0 = arith.constant 0 : i32
    %c0_i32_1 = arith.constant 0 : i32
    return %c0_i32, %c0_i32_0 : i32, i32
  }
  func.func @transform_9(%arg0: i32) -> (i32, i32) {
    %c0_i32 = arith.constant 0 : i32
    %c0_i32_0 = arith.constant 0 : i32
    return %arg0, %c0_i32 : i32, i32
  }
}

</mosaic_0001>

<llo_original>
// kernel: tpu_custom_call.1
$region0: #{tpu_custom_call.1}
  #allocation0 [shape = 'u32[]', space=smem, size = 0x4, offset = 0x4, fixed_abs, tag = 'smem constant byte address 0x4 - core index']
  #allocation1 [shape = 'u32[72,128]{1,0:T(1,128)}', space=vmem, size = 0x9000, scoped, tag = 'internal scratch']
  #allocation2 [shape = 'f32[1,1]{1,0:T(1,128)S(1)}', space=vmem, size = 0x200, scoped, tag = 'scoped memory for tpu_custom_call.1']
  %s0 = inlined_call_operand.vmem [shape: f32[12,12], index: 0, kind: input, shape index: {}]
  %s1 = inlined_call_operand.vmem [shape: f32[12,4], index: 1, kind: input, shape index: {}]
  %s2 = inlined_call_operand.hbm [shape: bf16[12,512], index: 2, kind: input, shape index: {}]
  %s3 = inlined_call_operand.vmem [shape: bf16[4,512], index: 3, kind: input, shape index: {}]
  %s4 = inlined_call_operand.hbm [shape: f32[1,512], index: 4, kind: input, shape index: {}]
  %s5 = inlined_call_operand.hbm [shape: bf16[512,384], index: 5, kind: input, shape index: {}]
  %s6 = inlined_call_operand.vmem [shape: f32[1,384], index: 6, kind: input, shape index: {}]
  %s7 = inlined_call_operand.hbm [shape: f32[1,384], index: 7, kind: input, shape index: {}]
  %s8 = inlined_call_operand.<no memory space> [shape: f32[1,1], index: 8, kind: input, shape index: {}]
  %s9 = inlined_call_operand.vmem [shape: f32[12,1], index: 9, kind: output, shape index: {}]
  %s10 = sld [smem:[#allocation0]]
  $region85: #{tpu_custom_call.1} parent=0
    _
  %s12 = ssub.s32 1, %s10
  %s13 = scalar_select 0, %s12, %s10
  %v14 = vstv %s8
  %15 = vst [vmem:[#allocation2] sm:$0x1] %v14
  $region1: #{tpu_custom_call.1} parent=0
    #allocation3 [shape = 'u8[16384]{0}', space=vmem, size = 0x4000, scoped, tag = 'input window, operand 2, single buffered']
    #allocation4 [shape = 's32[2]{0}', space=sflag, size = 0x8, scoped, tag = 'scoped memory for tpu_custom_call.1']
    #allocation5 [shape = 'u8[2048]{0}', space=vmem, size = 0x800, scoped, tag = 'input window, operand 4, single buffered']
    #allocation6 [shape = 's32[1]{0}', space=sflag, size = 0x4, scoped, tag = 'scoped memory for tpu_custom_call.1']
    #allocation7 [shape = 'u8[393216]{0}', space=vmem, size = 0x60000, scoped, tag = 'input window, operand 5, single buffered']
    #allocation8 [shape = 'u8[1536]{0}', space=vmem, size = 0x800, scoped, tag = 'input window, operand 7, single buffered']
    #allocation9 [shape = 's32[1]{0}', space=sflag, size = 0x4, scoped, tag = 'scoped memory for tpu_custom_call.1']
    %16 = vsyncpa [#allocation4], 0
    %17 = vsyncpa [#allocation6], 0
    %18 = vsyncpa [#allocation9], 0
    loop: start=0, step=1, limit=4
    $region2: #{tpu_custom_call.1} parent=1 // loop_pre_header
      _
    $region3: #{tpu_custom_call.1} parent=1 // loop_header
      %s20 = sphi 0, %s24
      %p21 = scmp.ge.s32.totalorder %s20, 4
      %s30 = sphi 0, %s32
      %s33 = sphi 0, %s30
      %s34 = sphi 0, %s33
      %s50 = sphi 0, %s34
      %s56 = sphi 0, %s58
      %s59 = sphi 0, %s56
      %s60 = sphi 0, %s59
      %s76 = sphi 0, %s60
      %s80 = sphi 0, %s80
      %s82 = sphi 0, %s80
      %s83 = sphi 0, %s82
      %s97 = sphi 0, %s83
      %s101 = sphi 0, %s101
      %s103 = sphi 0, %s101
      %s104 = sphi 0, %s103
      %s118 = sphi 0, %s104
      %s122 = sphi 0, %s122
      %s124 = sphi 0, %s122
      %s125 = sphi 0, %s124
      %s139 = sphi 0, %s125
      %s143 = sphi 0, %s143
      %s145 = sphi 0, %s143
      %s146 = sphi 0, %s145
      %s160 = sphi 0, %s146
      %s164 = sphi 0, %s164
      %s166 = sphi 0, %s164
      %s167 = sphi 0, %s166
      %s181 = sphi 0, %s167
      %s185 = sphi 0, %s185
      %s187 = sphi 0, %s185
      %s188 = sphi 0, %s187
      %s202 = sphi 0, %s188
      %s206 = sphi 0, %s206
      %s208 = sphi 0, %s206
      %s209 = sphi 0, %s208
      %s223 = sphi 0, %s209
      %s229 = sphi 0, %s231
      %s232 = sphi 0, %s229
      %s233 = sphi 0, %s232
      %s249 = sphi 0, %s233
    $region4: #{tpu_custom_call.1} parent=1 // loop_header_branch
      %23 = sbr.rel (%p21) target = $region8
    $region5: #{tpu_custom_call.1} parent=1 // loop_body
      %s25 = ssub.s32 %s20, 1
      %s26 = ssub.s32 %s20, 2
      %s27 = sadd.s32 %s20, 1
      %s28 = ssub.s32 %s20, %s27
      %p29 = scmp.eq.s32.totalorder %s28, 0
      %s31 = sadd.s32 %s30, 1
      %s32 = scalar_select %p29, %s30, %s31
      %p35 = pneg %p29
      %p36 = scmp.eq.s32.totalorder %s20, 1
      %p37 = por %p35, %p36
      %p38 = scmp.ne.s32.totalorder %s30, %s33
      %p39 = scmp.eq.s32.totalorder %s20, 0
      %p40 = por %p38, %p39
      %p41 = scmp.ne.s32.totalorder %s30, %s33
      %p42 = scmp.eq.s32.totalorder %s25, 1
      %p43 = por %p41, %p42
      %p44 = scmp.ne.s32.totalorder %s33, %s34
      %p45 = scmp.eq.s32.totalorder %s25, 0
      %p46 = por %p44, %p45
      %p47 = scmp.ne.s32.totalorder %s33, %s34
      %p48 = scmp.eq.s32.totalorder %s26, 1
      %p49 = por %p47, %p48
      %p51 = scmp.ne.s32.totalorder %s34, %s50
      %p52 = scmp.eq.s32.totalorder %s26, 0
      %p53 = por %p51, %p52
      %s54 = ssub.s32 %s20, %s27
      %p55 = scmp.eq.s32.totalorder %s54, 0
      %s57 = sadd.s32 %s56, 1
      %s58 = scalar_select %p55, %s56, %s57
      %p61 = pneg %p55
      %p62 = scmp.eq.s32.totalorder %s20, 1
      %p63 = por %p61, %p62
      %p64 = scmp.ne.s32.totalorder %s56, %s59
      %p65 = scmp.eq.s32.totalorder %s20, 0
      %p66 = por %p64, %p65
      %p67 = scmp.ne.s32.totalorder %s56, %s59
      %p68 = scmp.eq.s32.totalorder %s25, 1
      %p69 = por %p67, %p68
      %p70 = scmp.ne.s32.totalorder %s59, %s60
      %p71 = scmp.eq.s32.totalorder %s25, 0
      %p72 = por %p70, %p71
      %p73 = scmp.ne.s32.totalorder %s59, %s60
      %p74 = scmp.eq.s32.totalorder %s26, 1
      %p75 = por %p73, %p74
      %p77 = scmp.ne.s32.totalorder %s60, %s76
      %p78 = scmp.eq.s32.totalorder %s26, 0
      %p79 = por %p77, %p78
      %s81 = sadd.s32 %s80, 1
      %p84 = scmp.eq.s32.totalorder %s20, 1
      %p85 = scmp.ne.s32.totalorder %s80, %s82
      %p86 = scmp.eq.s32.totalorder %s20, 0
      %p87 = por %p85, %p86
      %p88 = scmp.ne.s32.totalorder %s80, %s82
      %p89 = scmp.eq.s32.totalorder %s25, 1
      %p90 = por %p88, %p89
      %p91 = scmp.ne.s32.totalorder %s82, %s83
      %p92 = scmp.eq.s32.totalorder %s25, 0
      %p93 = por %p91, %p92
      %p94 = scmp.ne.s32.totalorder %s82, %s83
      %p95 = scmp.eq.s32.totalorder %s26, 1
      %p96 = por %p94, %p95
      %p98 = scmp.ne.s32.totalorder %s83, %s97
      %p99 = scmp.eq.s32.totalorder %s26, 0
      %p100 = por %p98, %p99
      %s102 = sadd.s32 %s101, 1
      %p105 = scmp.eq.s32.totalorder %s20, 1
      %p106 = scmp.ne.s32.totalorder %s101, %s103
      %p107 = scmp.eq.s32.totalorder %s20, 0
      %p108 = por %p106, %p107
      %p109 = scmp.ne.s32.totalorder %s101, %s103
      %p110 = scmp.eq.s32.totalorder %s25, 1
      %p111 = por %p109, %p110
      %p112 = scmp.ne.s32.totalorder %s103, %s104
      %p113 = scmp.eq.s32.totalorder %s25, 0
      %p114 = por %p112, %p113
      %p115 = scmp.ne.s32.totalorder %s103, %s104
      %p116 = scmp.eq.s32.totalorder %s26, 1
      %p117 = por %p115, %p116
      %p119 = scmp.ne.s32.totalorder %s104, %s118
      %p120 = scmp.eq.s32.totalorder %s26, 0
      %p121 = por %p119, %p120
      %s123 = sadd.s32 %s122, 1
      %p126 = scmp.eq.s32.totalorder %s20, 1
      %p127 = scmp.ne.s32.totalorder %s122, %s124
      %p128 = scmp.eq.s32.totalorder %s20, 0
      %p129 = por %p127, %p128
      %p130 = scmp.ne.s32.totalorder %s122, %s124
      %p131 = scmp.eq.s32.totalorder %s25, 1
      %p132 = por %p130, %p131
      %p133 = scmp.ne.s32.totalorder %s124, %s125
      %p134 = scmp.eq.s32.totalorder %s25, 0
      %p135 = por %p133, %p134
      %p136 = scmp.ne.s32.totalorder %s124, %s125
      %p137 = scmp.eq.s32.totalorder %s26, 1
      %p138 = por %p136, %p137
      %p140 = scmp.ne.s32.totalorder %s125, %s139
      %p141 = scmp.eq.s32.totalorder %s26, 0
      %p142 = por %p140, %p141
      %s144 = sadd.s32 %s143, 1
      %p147 = scmp.eq.s32.totalorder %s20, 1
      %p148 = scmp.ne.s32.totalorder %s143, %s145
      %p149 = scmp.eq.s32.totalorder %s20, 0
      %p150 = por %p148, %p149
      %p151 = scmp.ne.s32.totalorder %s143, %s145
      %p152 = scmp.eq.s32.totalorder %s25, 1
      %p153 = por %p151, %p152
      %p154 = scmp.ne.s32.totalorder %s145, %s146
      %p155 = scmp.eq.s32.totalorder %s25, 0
      %p156 = por %p154, %p155
      %p157 = scmp.ne.s32.totalorder %s145, %s146
      %p158 = scmp.eq.s32.totalorder %s26, 1
      %p159 = por %p157, %p158
      %p161 = scmp.ne.s32.totalorder %s146, %s160
      %p162 = scmp.eq.s32.totalorder %s26, 0
      %p163 = por %p161, %p162
      %s165 = sadd.s32 %s164, 1
      %p168 = scmp.eq.s32.totalorder %s20, 1
      %p169 = scmp.ne.s32.totalorder %s164, %s166
      %p170 = scmp.eq.s32.totalorder %s20, 0
      %p171 = por %p169, %p170
      %p172 = scmp.ne.s32.totalorder %s164, %s166
      %p173 = scmp.eq.s32.totalorder %s25, 1
      %p174 = por %p172, %p173
      %p175 = scmp.ne.s32.totalorder %s166, %s167
      %p176 = scmp.eq.s32.totalorder %s25, 0
      %p177 = por %p175, %p176
      %p178 = scmp.ne.s32.totalorder %s166, %s167
      %p179 = scmp.eq.s32.totalorder %s26, 1
      %p180 = por %p178, %p179
      %p182 = scmp.ne.s32.totalorder %s167, %s181
      %p183 = scmp.eq.s32.totalorder %s26, 0
      %p184 = por %p182, %p183
      %s186 = sadd.s32 %s185, 1
      %p189 = scmp.eq.s32.totalorder %s20, 1
      %p190 = scmp.ne.s32.totalorder %s185, %s187
      %p191 = scmp.eq.s32.totalorder %s20, 0
      %p192 = por %p190, %p191
      %p193 = scmp.ne.s32.totalorder %s185, %s187
      %p194 = scmp.eq.s32.totalorder %s25, 1
      %p195 = por %p193, %p194
      %p196 = scmp.ne.s32.totalorder %s187, %s188
      %p197 = scmp.eq.s32.totalorder %s25, 0
      %p198 = por %p196, %p197
      %p199 = scmp.ne.s32.totalorder %s187, %s188
      %p200 = scmp.eq.s32.totalorder %s26, 1
      %p201 = por %p199, %p200
      %p203 = scmp.ne.s32.totalorder %s188, %s202
      %p204 = scmp.eq.s32.totalorder %s26, 0
      %p205 = por %p203, %p204
      %s207 = sadd.s32 %s206, 1
      %p210 = scmp.eq.s32.totalorder %s20, 1
      %p211 = scmp.ne.s32.totalorder %s206, %s208
      %p212 = scmp.eq.s32.totalorder %s20, 0
      %p213 = por %p211, %p212
      %p214 = scmp.ne.s32.totalorder %s206, %s208
      %p215 = scmp.eq.s32.totalorder %s25, 1
      %p216 = por %p214, %p215
      %p217 = scmp.ne.s32.totalorder %s208, %s209
      %p218 = scmp.eq.s32.totalorder %s25, 0
      %p219 = por %p217, %p218
      %p220 = scmp.ne.s32.totalorder %s208, %s209
      %p221 = scmp.eq.s32.totalorder %s26, 1
      %p222 = por %p220, %p221
      %p224 = scmp.ne.s32.totalorder %s209, %s223
      %p225 = scmp.eq.s32.totalorder %s26, 0
      %p226 = por %p224, %p225
      %s227 = ssub.s32 %s20, %s27
      %p228 = scmp.eq.s32.totalorder %s227, 0
      %s230 = sadd.s32 %s229, 1
      %s231 = scalar_select %p228, %s229, %s230
      %p234 = pneg %p228
      %p235 = scmp.eq.s32.totalorder %s20, 1
      %p236 = por %p234, %p235
      %p237 = scmp.ne.s32.totalorder %s229, %s232
      %p238 = scmp.eq.s32.totalorder %s20, 0
      %p239 = por %p237, %p238
      %p240 = scmp.ne.s32.totalorder %s229, %s232
      %p241 = scmp.eq.s32.totalorder %s25, 1
      %p242 = por %p240, %p241
      %p243 = scmp.ne.s32.totalorder %s232, %s233
      %p244 = scmp.eq.s32.totalorder %s25, 0
      %p245 = por %p243, %p244
      %p246 = scmp.ne.s32.totalorder %s232, %s233
      %p247 = scmp.eq.s32.totalorder %s26, 1
      %p248 = por %p246, %p247
      %p250 = scmp.ne.s32.totalorder %s233, %s249
      %p251 = scmp.eq.s32.totalorder %s26, 0
      %p252 = por %p250, %p251
      %p253 = scmp.le.s32.totalorder 1, %s20
      %p254 = scmp.lt.s32.totalorder %s20, 3
      %p255 = pnand %p253, %p254
      %p256 = pneg %p255
      // Predicated region
      $region9: #{tpu_custom_call.1} parent=5 // pred_check
        _
      $region10: #{tpu_custom_call.1} parent=5 // pred_check_branch
        %258 = sbr.rel (%p255) target = $region12
      $region11: #{tpu_custom_call.1} parent=5 // pred_region
        %s259 = ssub.s32 %s20, 1
        // Predicated region
        $region13: #{tpu_custom_call.1} parent=11 // pred_check
          %p260 = pneg %p93
        $region14: #{tpu_custom_call.1} parent=11 // pred_check_branch
          %262 = sbr.rel (%p260) target = $region16
        $region15: #{tpu_custom_call.1} parent=11 // pred_region
          %264 = vsyncadd [#allocation4], 0
          %s265 = sshll.u32 %s2, 4
          %s266 = int_to_ptr.hbm [resolvable:$true] %s265
          %s267 = sshll.u32 [#allocation3], 4
          %s268 = int_to_ptr.vmem [resolvable:$true] %s267
          %273 = dma.hbm_to_vmem [thread:$0]  %s266, 512, %s268, [#allocation4], 256, 256, 16
        $region16: #{tpu_custom_call.1} parent=11 // pred_fallthru
          _
        // Predicated region
        $region17: #{tpu_custom_call.1} parent=11 // pred_check
          %p274 = pneg %p114
        $region18: #{tpu_custom_call.1} parent=11 // pred_check_branch
          %276 = sbr.rel (%p274) target = $region20
        $region19: #{tpu_custom_call.1} parent=11 // pred_region
          _
        $region20: #{tpu_custom_call.1} parent=11 // pred_fallthru
          _
        // Predicated region
        $region21: #{tpu_custom_call.1} parent=11 // pred_check
          %p277 = pneg %p135
        $region22: #{tpu_custom_call.1} parent=11 // pred_check_branch
          %279 = sbr.rel (%p277) target = $region24
        $region23: #{tpu_custom_call.1} parent=11 // pred_region
          %281 = vsyncadd [#allocation6], 0
          %s283 = sshll.u32 %s4, 4
          %s284 = int_to_ptr.hbm [resolvable:$true] %s283
          %s285 = sshll.u32 [#allocation5], 4
          %s286 = int_to_ptr.vmem [resolvable:$true] %s285
          %288 = dma.hbm_to_vmem [thread:$0]  %s284, 64, %s286, [#allocation6]
        $region24: #{tpu_custom_call.1} parent=11 // pred_fallthru
          _
        // Predicated region
        $region25: #{tpu_custom_call.1} parent=11 // pred_check
          %p289 = pneg %p156
        $region26: #{tpu_custom_call.1} parent=11 // pred_check_branch
          %291 = sbr.rel (%p289) target = $region28
        $region27: #{tpu_custom_call.1} parent=11 // pred_region
          %293 = vsyncadd [#allocation6], 0
          %s294 = sshll.u32 %s5, 4
          %s295 = int_to_ptr.hbm [resolvable:$true] %s294
          %s296 = sshll.u32 [#allocation7], 4
          %s297 = int_to_ptr.vmem [resolvable:$true] %s296
          %302 = dma.hbm_to_vmem [thread:$0]  %s295, 12288, %s297, [#allocation6], 192, 192, 12
        $region28: #{tpu_custom_call.1} parent=11 // pred_fallthru
          _
        // Predicated region
        $region29: #{tpu_custom_call.1} parent=11 // pred_check
          %p303 = pneg %p177
        $region30: #{tpu_custom_call.1} parent=11 // pred_check_branch
          %305 = sbr.rel (%p303) target = $region32
        $region31: #{tpu_custom_call.1} parent=11 // pred_region
          _
        $region32: #{tpu_custom_call.1} parent=11 // pred_fallthru
          _
        // Predicated region
        $region33: #{tpu_custom_call.1} parent=11 // pred_check
          %p306 = pneg %p198
        $region34: #{tpu_custom_call.1} parent=11 // pred_check_branch
          %308 = sbr.rel (%p306) target = $region36
        $region35: #{tpu_custom_call.1} parent=11 // pred_region
          %310 = vsyncadd [#allocation9], 0
          %s312 = sshll.u32 %s7, 4
          %s313 = int_to_ptr.hbm [resolvable:$true] %s312
          %s314 = sshll.u32 [#allocation8], 4
          %s315 = int_to_ptr.vmem [resolvable:$true] %s314
          %317 = dma.hbm_to_vmem [thread:$0]  %s313, 48, %s315, [#allocation9]
        $region36: #{tpu_custom_call.1} parent=11 // pred_fallthru
          _
        // Predicated region
        $region37: #{tpu_custom_call.1} parent=11 // pred_check
          %p318 = pneg %p219
        $region38: #{tpu_custom_call.1} parent=11 // pred_check_branch
          %320 = sbr.rel (%p318) target = $region40
        $region39: #{tpu_custom_call.1} parent=11 // pred_region
          _
        $region40: #{tpu_custom_call.1} parent=11 // pred_fallthru
          _
      $region12: #{tpu_custom_call.1} parent=5 // pred_fallthru
        _
      %p321 = scmp.lt.s32.totalorder %s20, 2
      // Predicated region
      $region41: #{tpu_custom_call.1} parent=5 // pred_check
        %p322 = pneg %p321
      $region42: #{tpu_custom_call.1} parent=5 // pred_check_branch
        %324 = sbr.rel (%p322) target = $region44
      $region43: #{tpu_custom_call.1} parent=5 // pred_region
        // Predicated region
        $region45: #{tpu_custom_call.1} parent=43 // pred_check
          %p325 = pneg %p40
        $region46: #{tpu_custom_call.1} parent=43 // pred_check_branch
          %327 = sbr.rel (%p325) target = $region48
        $region47: #{tpu_custom_call.1} parent=43 // pred_region
          %p328 = scmp.lt.s32.totalorder %s20, 1
          %s329 = scalar_select %p328, %s20, 1
          %s330 = smul.addr %s329, 8
          %s331 = scalar_lea.vmem %s0, %s330
        $region48: #{tpu_custom_call.1} parent=43 // pred_fallthru
          _
        // Predicated region
        $region49: #{tpu_custom_call.1} parent=43 // pred_check
          %p332 = pneg %p66
        $region50: #{tpu_custom_call.1} parent=43 // pred_check_branch
          %334 = sbr.rel (%p332) target = $region52
        $region51: #{tpu_custom_call.1} parent=43 // pred_region
          %p335 = scmp.lt.s32.totalorder %s20, 1
          %s336 = scalar_select %p335, %s20, 1
          %s337 = smul.addr %s336, 8
          %s338 = scalar_lea.vmem %s1, %s337
        $region52: #{tpu_custom_call.1} parent=43 // pred_fallthru
          _
      $region44: #{tpu_custom_call.1} parent=5 // pred_fallthru
        _
      %p339 = scmp.le.s32.totalorder 1, %s20
      %p340 = scmp.lt.s32.totalorder %s20, 3
      %p341 = pnand %p339, %p340
      %p342 = pneg %p341
      // Predicated region
      $region53: #{tpu_custom_call.1} parent=5 // pred_check
        _
      $region54: #{tpu_custom_call.1} parent=5 // pred_check_branch
        %344 = sbr.rel (%p341) target = $region56
      $region55: #{tpu_custom_call.1} parent=5 // pred_region
        %s345 = ssub.s32 %s20, 1
        // Predicated region
        $region57: #{tpu_custom_call.1} parent=55 // pred_check
          %p346 = pneg %p93
        $region58: #{tpu_custom_call.1} parent=55 // pred_check_branch
          %348 = sbr.rel (%p346) target = $region60
        $region59: #{tpu_custom_call.1} parent=55 // pred_region
          %350 = dma.done [#allocation4], 512
        $region60: #{tpu_custom_call.1} parent=55 // pred_fallthru
          _
        // Predicated region
        $region61: #{tpu_custom_call.1} parent=55 // pred_check
          %p351 = pneg %p135
        $region62: #{tpu_custom_call.1} parent=55 // pred_check_branch
          %353 = sbr.rel (%p351) target = $region64
        $region63: #{tpu_custom_call.1} parent=55 // pred_region
          %355 = dma.done [#allocation6], 64
        $region64: #{tpu_custom_call.1} parent=55 // pred_fallthru
          _
        // Predicated region
        $region65: #{tpu_custom_call.1} parent=55 // pred_check
          %p356 = pneg %p156
        $region66: #{tpu_custom_call.1} parent=55 // pred_check_branch
          %358 = sbr.rel (%p356) target = $region68
        $region67: #{tpu_custom_call.1} parent=55 // pred_region
          %360 = dma.done [#allocation6], 12288
        $region68: #{tpu_custom_call.1} parent=55 // pred_fallthru
          _
        // Predicated region
        $region69: #{tpu_custom_call.1} parent=55 // pred_check
          %p361 = pneg %p198
        $region70: #{tpu_custom_call.1} parent=55 // pred_check_branch
          %363 = sbr.rel (%p361) target = $region72
        $region71: #{tpu_custom_call.1} parent=55 // pred_region
          %365 = dma.done [#allocation9], 48
        $region72: #{tpu_custom_call.1} parent=55 // pred_fallthru
          _
        %p366 = scmp.lt.s32.totalorder %s25, 1
        %s367 = scalar_select %p366, %s25, 1
        %s368 = smul.addr %s367, 8
        %s369 = scalar_lea.vmem %s0, %s368
        %p370 = pneg %p46
        %p371 = pneg %p43
        %p372 = scmp.lt.s32.totalorder %s25, 1
        %s373 = scalar_select %p372, %s25, 1
        %s374 = smul.addr %s373, 8
        %s375 = scalar_lea.vmem %s1, %s374
        %p376 = pneg %p72
        %p377 = pneg %p69
        %p378 = pneg %p93
        %p379 = pneg %p90
        %p380 = pneg %p114
        %p381 = pneg %p111
        %p382 = pneg %p135
        %p383 = pneg %p132
        %p384 = pneg %p156
        %p385 = pneg %p153
        %p386 = pneg %p177
        %p387 = pneg %p174
        %p388 = pneg %p198
        %p389 = pneg %p195
        %p390 = pneg %p219
        %p391 = pneg %p216
        %p392 = pneg %p245
        %p393 = pneg %p242
        %p394 = scmp.lt.s32.totalorder %s25, 1
        %s395 = scalar_select %p394, %s25, 1
        %s396 = smul.addr %s395, 8
        %s397 = scalar_lea.vmem %s9, %s396
        %p398 = scmp.lt.s32.totalorder %s25, 1
        %s399 = scalar_select %p398, %s25, 1
        %s400 = smul.addr %s399, 8
        %s401 = scalar_lea.vmem %s0, %s400
        %p402 = scmp.lt.s32.totalorder %s25, 1
        %s403 = scalar_select %p402, %s25, 1
        %s404 = smul.addr %s403, 8
        %s405 = scalar_lea.vmem %s1, %s404
        %p406 = scmp.lt.s32.totalorder %s25, 1
        %s407 = scalar_select %p406, %s25, 1
        %s408 = smul.addr %s407, 8
        %s409 = scalar_lea.vmem %s9, %s408
        %v411 = vld [vmem:[%s401] sm:$0xff]
        %v412 = vpack.c.bf16 %v411, %v411
        %v413 = vld [vmem:[%s405] sm:$0xff]
        %v414 = vpack.c.bf16 %v413, %v413
        %v415 = vld [vmem:[#allocation3] sm:$0xff]
        %v416 = vld [vmem:[#allocation3 + $0x8] sm:$0xff]
        %v417 = vld [vmem:[#allocation3 + $0x10] sm:$0x33]
        %v418 = vld [vmem:[#allocation3 + $0x18] sm:$0x33]
        %v419 = vld [vmem:[%s3] sm:$0xff]
        %421 = vst [vmem:[#allocation1] ss:$4 sm:$0xff] %v419
        %v422 = vld.sshfl [vmem:[#allocation1] sm:$0xff pattern:$0x73625140]
        %v423 = vld.sshfl [vmem:[#allocation1 + $0x8] sm:$0xff pattern:$0x73625140]
        %v424 = vld.sshfl [vmem:[#allocation1 + $0x10] sm:$0xff pattern:$0x73625140]
        %v425 = vld.sshfl [vmem:[#allocation1 + $0x18] sm:$0xff pattern:$0x73625140]
        %vm426 = vcmask 31744
        %v428 = vsel %vm426, %v414, 0
        %vm430 = vcmask 1041408
        %v431 = vsel %vm430, %v422, 0
        %v433 = vsel %vm430, %v423, 0
        %v435 = vsel %vm430, %v424, 0
        %v437 = vsel %vm430, %v425, 0
        %439 = vmatpush.bf16.msra.mxu0 0
        %440 = vmatpush.bf16.msra.mxu0 0
        %441 = vmatpush.bf16.msra.mxu0 0
        %442 = vmatpush.bf16.msra.mxu0 0
        %443 = vmatpush.bf16.msra.mxu0 0
        %444 = vmatpush.bf16.msra.mxu0 0
        %445 = vmatpush.bf16.msra.mxu0 0
        %446 = vmatpush.bf16.msra.mxu0 %v431
        %447 = vmatmul.bf16.gmra.mxu0 %v428
        %v448 = vpop.f32.mrf.mxu0
        %v449 = vadd.f32 0.0, %v448
        %v450 = vpop.f32.mrf.mxu0
        %451 = vdwg.mxu0
        %452 = vmatpush.bf16.msra.mxu0 0
        %453 = vmatpush.bf16.msra.mxu0 0
        %454 = vmatpush.bf16.msra.mxu0 0
        %455 = vmatpush.bf16.msra.mxu0 0
        %456 = vmatpush.bf16.msra.mxu0 0
        %457 = vmatpush.bf16.msra.mxu0 0
        %458 = vmatpush.bf16.msra.mxu0 0
        %459 = vmatpush.bf16.msra.mxu0 %v433
        %460 = vmatmul.bf16.gmra.mxu0 %v428
        %v461 = vpop.f32.mrf.mxu0
        %v462 = vadd.f32 0.0, %v461
        %v463 = vpop.f32.mrf.mxu0
        %464 = vdwg.mxu0
        %465 = vmatpush.bf16.msra.mxu0 0
        %466 = vmatpush.bf16.msra.mxu0 0
        %467 = vmatpush.bf16.msra.mxu0 0
        %468 = vmatpush.bf16.msra.mxu0 0
        %469 = vmatpush.bf16.msra.mxu0 0
        %470 = vmatpush.bf16.msra.mxu0 0
        %471 = vmatpush.bf16.msra.mxu0 0
        %472 = vmatpush.bf16.msra.mxu0 %v435
        %473 = vmatmul.bf16.gmra.mxu0 %v428
        %v474 = vpop.f32.mrf.mxu0
        %v475 = vadd.f32 0.0, %v474
        %v476 = vpop.f32.mrf.mxu0
        %477 = vdwg.mxu0
        %478 = vmatpush.bf16.msra.mxu0 0
        %479 = vmatpush.bf16.msra.mxu0 0
        %480 = vmatpush.bf16.msra.mxu0 0
        %481 = vmatpush.bf16.msra.mxu0 0
        %482 = vmatpush.bf16.msra.mxu0 0
        %483 = vmatpush.bf16.msra.mxu0 0
        %484 = vmatpush.bf16.msra.mxu0 0
        %485 = vmatpush.bf16.msra.mxu0 %v437
        %486 = vmatmul.bf16.gmra.mxu0 %v428
        %v487 = vpop.f32.mrf.mxu0
        %v488 = vadd.f32 0.0, %v487
        %v489 = vpop.f32.mrf.mxu0
        %490 = vdwg.mxu0
        %v495 = vunpack.c.l.b16 %v415
        %v496 = vunpack.c.h.b16 %v415
        %v497 = vunpack.c.l.b16 %v416
        %v498 = vunpack.c.h.b16 %v416
        %v499 = vunpack.c.l.b16 %v417
        %v500 = vunpack.c.h.b16 %v417
        %v501 = vunpack.c.l.b16 %v418
        %v502 = vunpack.c.h.b16 %v418
        %v503 = vpack.c.b16 %v499, %v495
        %v504 = vpack.c.b16 %v500, %v496
        %v505 = vpack.c.b16 %v501, %v497
        %v506 = vpack.c.b16 %v502, %v498
        %vm507 = vcmask 97280
        %v509 = vsel %vm507, %v412, 0
        %vm511 = vcmask 1045504
        %v513 = vsel %vm511, %v503, 0
        %v516 = vsel %vm511, %v504, 0
        %v519 = vsel %vm511, %v505, 0
        %v522 = vsel %vm511, %v506, 0
        %524 = vmatpush.bf16.msra.mxu0 0
        %525 = vmatpush.bf16.msra.mxu0 0
        %526 = vmatpush.bf16.msra.mxu0 0
        %527 = vmatpush.bf16.msra.mxu0 0
        %528 = vmatpush.bf16.msra.mxu0 0
        %529 = vmatpush.bf16.msra.mxu0 0
        %530 = vmatpush.bf16.msra.mxu0 0
        %531 = vmatpush.bf16.msra.mxu0 %v513
        %532 = vmatmul.bf16.gmra.mxu0 %v509
        %v533 = vpop.f32.mrf.mxu0
        %v534 = vadd.f32 %v449, %v533
        %v535 = vpop.f32.mrf.mxu0
        %536 = vdwg.mxu0
        %537 = vmatpush.bf16.msra.mxu0 0
        %538 = vmatpush.bf16.msra.mxu0 0
        %539 = vmatpush.bf16.msra.mxu0 0
        %540 = vmatpush.bf16.msra.mxu0 0
        %541 = vmatpush.bf16.msra.mxu0 0
        %542 = vmatpush.bf16.msra.mxu0 0
        %543 = vmatpush.bf16.msra.mxu0 0
        %544 = vmatpush.bf16.msra.mxu0 %v516
        %545 = vmatmul.bf16.gmra.mxu0 %v509
        %v546 = vpop.f32.mrf.mxu0
        %v547 = vadd.f32 %v462, %v546
        %v548 = vpop.f32.mrf.mxu0
        %549 = vdwg.mxu0
        %550 = vmatpush.bf16.msra.mxu0 0
        %551 = vmatpush.bf16.msra.mxu0 0
        %552 = vmatpush.bf16.msra.mxu0 0
        %553 = vmatpush.bf16.msra.mxu0 0
        %554 = vmatpush.bf16.msra.mxu0 0
        %555 = vmatpush.bf16.msra.mxu0 0
        %556 = vmatpush.bf16.msra.mxu0 0
        %557 = vmatpush.bf16.msra.mxu0 %v519
        %558 = vmatmul.bf16.gmra.mxu0 %v509
        %v559 = vpop.f32.mrf.mxu0
        %v560 = vadd.f32 %v475, %v559
        %v561 = vpop.f32.mrf.mxu0
        %562 = vdwg.mxu0
        %563 = vmatpush.bf16.msra.mxu0 0
        %564 = vmatpush.bf16.msra.mxu0 0
        %565 = vmatpush.bf16.msra.mxu0 0
        %566 = vmatpush.bf16.msra.mxu0 0
        %567 = vmatpush.bf16.msra.mxu0 0
        %568 = vmatpush.bf16.msra.mxu0 0
        %569 = vmatpush.bf16.msra.mxu0 0
        %570 = vmatpush.bf16.msra.mxu0 %v522
        %571 = vmatmul.bf16.gmra.mxu0 %v509
        %v572 = vpop.f32.mrf.mxu0
        %v573 = vadd.f32 %v488, %v572
        %v574 = vpop.f32.mrf.mxu0
        %575 = vdwg.mxu0
        %v576 = vld [vmem:[#allocation5] sm:$0xf]
        %v578 = vperm.slane %v576, 0
        %v579 = vperm.slane %v576, 1
        %v580 = vperm.slane %v576, 2
        %v581 = vperm.slane %v576, 3
        %v586 = vadd.f32 %v534, %v578
        %v587 = vadd.f32 %v547, %v579
        %v588 = vadd.f32 %v560, %v580
        %v589 = vadd.f32 %v573, %v581
        %v590 = vmax.f32 %v586, 0.0
        %v591 = vmax.f32 %v587, 0.0
        %v592 = vmax.f32 %v588, 0.0
        %v593 = vmax.f32 %v589, 0.0
        %v594 = vpack.c.bf16 %v590, %v590
        %v595 = vpack.c.bf16 %v591, %v591
        %v596 = vpack.c.bf16 %v592, %v592
        %v597 = vpack.c.bf16 %v593, %v593
        %v598 = vld [vmem:[#allocation7] sm:$0xff]
        %v599 = vld [vmem:[#allocation7 + $0x8] sm:$0xf]
        %v600 = vld [vmem:[#allocation7 + $0xc] sm:$0xff]
        %v601 = vld [vmem:[#allocation7 + $0x14] sm:$0xf]
        %v602 = vld [vmem:[#allocation7 + $0x18] sm:$0xff]
        %v603 = vld [vmem:[#allocation7 + $0x20] sm:$0xf]
        %v604 = vld [vmem:[#allocation7 + $0x24] sm:$0xff]
        %v605 = vld [vmem:[#allocation7 + $0x2c] sm:$0xf]
        %v606 = vld [vmem:[#allocation7 + $0x30] sm:$0xff]
        %v607 = vld [vmem:[#allocation7 + $0x38] sm:$0xf]
        %v608 = vld [vmem:[#allocation7 + $0x3c] sm:$0xff]
        %v609 = vld [vmem:[#allocation7 + $0x44] sm:$0xf]
        %v610 = vld [vmem:[#allocation7 + $0x48] sm:$0xff]
        %v611 = vld [vmem:[#allocation7 + $0x50] sm:$0xf]
        %v612 = vld [vmem:[#allocation7 + $0x54] sm:$0xff]
        %v613 = vld [vmem:[#allocation7 + $0x5c] sm:$0xf]
        %v614 = vld [vmem:[#allocation7 + $0x60] sm:$0xff]
        %v615 = vld [vmem:[#allocation7 + $0x68] sm:$0xf]
        %v616 = vld [vmem:[#allocation7 + $0x6c] sm:$0xff]
        %v617 = vld [vmem:[#allocation7 + $0x74] sm:$0xf]
        %v618 = vld [vmem:[#allocation7 + $0x78] sm:$0xff]
        %v619 = vld [vmem:[#allocation7 + $0x80] sm:$0xf]
        %v620 = vld [vmem:[#allocation7 + $0x84] sm:$0xff]
        %v621 = vld [vmem:[#allocation7 + $0x8c] sm:$0xf]
        %v622 = vld [vmem:[#allocation7 + $0x90] sm:$0xff]
        %v623 = vld [vmem:[#allocation7 + $0x98] sm:$0xf]
        %v624 = vld [vmem:[#allocation7 + $0x9c] sm:$0xff]
        %v625 = vld [vmem:[#allocation7 + $0xa4] sm:$0xf]
        %v626 = vld [vmem:[#allocation7 + $0xa8] sm:$0xff]
        %v627 = vld [vmem:[#allocation7 + $0xb0] sm:$0xf]
        %v628 = vld [vmem:[#allocation7 + $0xb4] sm:$0xff]
        %v629 = vld [vmem:[#allocation7 + $0xbc] sm:$0xf]
        %v630 = vld [vmem:[#allocation7 + $0xc0] sm:$0xff]
        %v631 = vld [vmem:[#allocation7 + $0xc8] sm:$0xf]
        %v632 = vld [vmem:[#allocation7 + $0xcc] sm:$0xff]
        %v633 = vld [vmem:[#allocation7 + $0xd4] sm:$0xf]
        %v634 = vld [vmem:[#allocation7 + $0xd8] sm:$0xff]
        %v635 = vld [vmem:[#allocation7 + $0xe0] sm:$0xf]
        %v636 = vld [vmem:[#allocation7 + $0xe4] sm:$0xff]
        %v637 = vld [vmem:[#allocation7 + $0xec] sm:$0xf]
        %v638 = vld [vmem:[#allocation7 + $0xf0] sm:$0xff]
        %v639 = vld [vmem:[#allocation7 + $0xf8] sm:$0xf]
        %v640 = vld [vmem:[#allocation7 + $0xfc] sm:$0xff]
        %v641 = vld [vmem:[#allocation7 + $0x104] sm:$0xf]
        %v642 = vld [vmem:[#allocation7 + $0x108] sm:$0xff]
        %v643 = vld [vmem:[#allocation7 + $0x110] sm:$0xf]
        %v644 = vld [vmem:[#allocation7 + $0x114] sm:$0xff]
        %v645 = vld [vmem:[#allocation7 + $0x11c] sm:$0xf]
        %v646 = vld [vmem:[#allocation7 + $0x120] sm:$0xff]
        %v647 = vld [vmem:[#allocation7 + $0x128] sm:$0xf]
        %v648 = vld [vmem:[#allocation7 + $0x12c] sm:$0xff]
        %v649 = vld [vmem:[#allocation7 + $0x134] sm:$0xf]
        %v650 = vld [vmem:[#allocation7 + $0x138] sm:$0xff]
        %v651 = vld [vmem:[#allocation7 + $0x140] sm:$0xf]
        %v652 = vld [vmem:[#allocation7 + $0x144] sm:$0xff]
        %v653 = vld [vmem:[#allocation7 + $0x14c] sm:$0xf]
        %v654 = vld [vmem:[#allocation7 + $0x150] sm:$0xff]
        %v655 = vld [vmem:[#allocation7 + $0x158] sm:$0xf]
        %v656 = vld [vmem:[#allocation7 + $0x15c] sm:$0xff]
        %v657 = vld [vmem:[#allocation7 + $0x164] sm:$0xf]
        %v658 = vld [vmem:[#allocation7 + $0x168] sm:$0xff]
        %v659 = vld [vmem:[#allocation7 + $0x170] sm:$0xf]
        %v660 = vld [vmem:[#allocation7 + $0x174] sm:$0xff]
        %v661 = vld [vmem:[#allocation7 + $0x17c] sm:$0xf]
        %v662 = vld [vmem:[#allocation7 + $0x180] sm:$0xff]
        %v663 = vld [vmem:[#allocation7 + $0x188] sm:$0xf]
        %v664 = vld [vmem:[#allocation7 + $0x18c] sm:$0xff]
        %v665 = vld [vmem:[#allocation7 + $0x194] sm:$0xf]
        %v666 = vld [vmem:[#allocation7 + $0x198] sm:$0xff]
        %v667 = vld [vmem:[#allocation7 + $0x1a0] sm:$0xf]
        %v668 = vld [vmem:[#allocation7 + $0x1a4] sm:$0xff]
        %v669 = vld [vmem:[#allocation7 + $0x1ac] sm:$0xf]
        %v670 = vld [vmem:[#allocation7 + $0x1b0] sm:$0xff]
        %v671 = vld [vmem:[#allocation7 + $0x1b8] sm:$0xf]
        %v672 = vld [vmem:[#allocation7 + $0x1bc] sm:$0xff]
        %v673 = vld [vmem:[#allocation7 + $0x1c4] sm:$0xf]
        %v674 = vld [vmem:[#allocation7 + $0x1c8] sm:$0xff]
        %v675 = vld [vmem:[#allocation7 + $0x1d0] sm:$0xf]
        %v676 = vld [vmem:[#allocation7 + $0x1d4] sm:$0xff]
        %v677 = vld [vmem:[#allocation7 + $0x1dc] sm:$0xf]
        %v678 = vld [vmem:[#allocation7 + $0x1e0] sm:$0xff]
        %v679 = vld [vmem:[#allocation7 + $0x1e8] sm:$0xf]
        %v680 = vld [vmem:[#allocation7 + $0x1ec] sm:$0xff]
        %v681 = vld [vmem:[#allocation7 + $0x1f4] sm:$0xf]
        %v682 = vld [vmem:[#allocation7 + $0x1f8] sm:$0xff]
        %v683 = vld [vmem:[#allocation7 + $0x200] sm:$0xf]
        %v684 = vld [vmem:[#allocation7 + $0x204] sm:$0xff]
        %v685 = vld [vmem:[#allocation7 + $0x20c] sm:$0xf]
        %v686 = vld [vmem:[#allocation7 + $0x210] sm:$0xff]
        %v687 = vld [vmem:[#allocation7 + $0x218] sm:$0xf]
        %v688 = vld [vmem:[#allocation7 + $0x21c] sm:$0xff]
        %v689 = vld [vmem:[#allocation7 + $0x224] sm:$0xf]
        %v690 = vld [vmem:[#allocation7 + $0x228] sm:$0xff]
        %v691 = vld [vmem:[#allocation7 + $0x230] sm:$0xf]
        %v692 = vld [vmem:[#allocation7 + $0x234] sm:$0xff]
        %v693 = vld [vmem:[#allocation7 + $0x23c] sm:$0xf]
        %v694 = vld [vmem:[#allocation7 + $0x240] sm:$0xff]
        %v695 = vld [vmem:[#allocation7 + $0x248] sm:$0xf]
        %v696 = vld [vmem:[#allocation7 + $0x24c] sm:$0xff]
        %v697 = vld [vmem:[#allocation7 + $0x254] sm:$0xf]
        %v698 = vld [vmem:[#allocation7 + $0x258] sm:$0xff]
        %v699 = vld [vmem:[#allocation7 + $0x260] sm:$0xf]
        %v700 = vld [vmem:[#allocation7 + $0x264] sm:$0xff]
        %v701 = vld [vmem:[#allocation7 + $0x26c] sm:$0xf]
        %v702 = vld [vmem:[#allocation7 + $0x270] sm:$0xff]
        %v703 = vld [vmem:[#allocation7 + $0x278] sm:$0xf]
        %v704 = vld [vmem:[#allocation7 + $0x27c] sm:$0xff]
        %v705 = vld [vmem:[#allocation7 + $0x284] sm:$0xf]
        %v706 = vld [vmem:[#allocation7 + $0x288] sm:$0xff]
        %v707 = vld [vmem:[#allocation7 + $0x290] sm:$0xf]
        %v708 = vld [vmem:[#allocation7 + $0x294] sm:$0xff]
        %v709 = vld [vmem:[#allocation7 + $0x29c] sm:$0xf]
        %v710 = vld [vmem:[#allocation7 + $0x2a0] sm:$0xff]
        %v711 = vld [vmem:[#allocation7 + $0x2a8] sm:$0xf]
        %v712 = vld [vmem:[#allocation7 + $0x2ac] sm:$0xff]
        %v713 = vld [vmem:[#allocation7 + $0x2b4] sm:$0xf]
        %v714 = vld [vmem:[#allocation7 + $0x2b8] sm:$0xff]
        %v715 = vld [vmem:[#allocation7 + $0x2c0] sm:$0xf]
        %v716 = vld [vmem:[#allocation7 + $0x2c4] sm:$0xff]
        %v717 = vld [vmem:[#allocation7 + $0x2cc] sm:$0xf]
        %v718 = vld [vmem:[#allocation7 + $0x2d0] sm:$0xff]
        %v719 = vld [vmem:[#allocation7 + $0x2d8] sm:$0xf]
        %v720 = vld [vmem:[#allocation7 + $0x2dc] sm:$0xff]
        %v721 = vld [vmem:[#allocation7 + $0x2e4] sm:$0xf]
        %v722 = vld [vmem:[#allocation7 + $0x2e8] sm:$0xff]
        %v723 = vld [vmem:[#allocation7 + $0x2f0] sm:$0xf]
        %v724 = vld [vmem:[#allocation7 + $0x2f4] sm:$0xff]
        %v725 = vld [vmem:[#allocation7 + $0x2fc] sm:$0xf]
        %v726 = vld [vmem:[%s6] sm:$0x7]
        %v728 = vperm.slane %v726, 0
        %v729 = vperm.slane %v726, 1
        %v730 = vperm.slane %v726, 2
        %v862 = vunpack.c.l.b16 %v598
        %v863 = vunpack.c.h.b16 %v598
        %v864 = vunpack.c.l.b16 %v599
        %v865 = vunpack.c.l.b16 %v600
        %v866 = vunpack.c.h.b16 %v600
        %v867 = vunpack.c.l.b16 %v601
        %v868 = vunpack.c.l.b16 %v602
        %v869 = vunpack.c.h.b16 %v602
        %v870 = vunpack.c.l.b16 %v603
        %v871 = vunpack.c.l.b16 %v604
        %v872 = vunpack.c.h.b16 %v604
        %v873 = vunpack.c.l.b16 %v605
        %v874 = vunpack.c.l.b16 %v606
        %v875 = vunpack.c.h.b16 %v606
        %v876 = vunpack.c.l.b16 %v607
        %v877 = vunpack.c.l.b16 %v608
        %v878 = vunpack.c.h.b16 %v608
        %v879 = vunpack.c.l.b16 %v609
        %v880 = vunpack.c.l.b16 %v610
        %v881 = vunpack.c.h.b16 %v610
        %v882 = vunpack.c.l.b16 %v611
        %v883 = vunpack.c.l.b16 %v612
        %v884 = vunpack.c.h.b16 %v612
        %v885 = vunpack.c.l.b16 %v613
        %v886 = vunpack.c.l.b16 %v614
        %v887 = vunpack.c.h.b16 %v614
        %v888 = vunpack.c.l.b16 %v615
        %v889 = vunpack.c.l.b16 %v616
        %v890 = vunpack.c.h.b16 %v616
        %v891 = vunpack.c.l.b16 %v617
        %v892 = vunpack.c.l.b16 %v618
        %v893 = vunpack.c.h.b16 %v618
        %v894 = vunpack.c.l.b16 %v619
        %v895 = vunpack.c.l.b16 %v620
        %v896 = vunpack.c.h.b16 %v620
        %v897 = vunpack.c.l.b16 %v621
        %v898 = vunpack.c.l.b16 %v622
        %v899 = vunpack.c.h.b16 %v622
        %v900 = vunpack.c.l.b16 %v623
        %v901 = vunpack.c.l.b16 %v624
        %v902 = vunpack.c.h.b16 %v624
        %v903 = vunpack.c.l.b16 %v625
        %v904 = vunpack.c.l.b16 %v626
        %v905 = vunpack.c.h.b16 %v626
        %v906 = vunpack.c.l.b16 %v627
        %v907 = vunpack.c.l.b16 %v628
        %v908 = vunpack.c.h.b16 %v628
        %v909 = vunpack.c.l.b16 %v629
        %v910 = vunpack.c.l.b16 %v630
        %v911 = vunpack.c.h.b16 %v630
        %v912 = vunpack.c.l.b16 %v631
        %v913 = vunpack.c.l.b16 %v632
        %v914 = vunpack.c.h.b16 %v632
        %v915 = vunpack.c.l.b16 %v633
        %v916 = vunpack.c.l.b16 %v634
        %v917 = vunpack.c.h.b16 %v634
        %v918 = vunpack.c.l.b16 %v635
        %v919 = vunpack.c.l.b16 %v636
        %v920 = vunpack.c.h.b16 %v636
        %v921 = vunpack.c.l.b16 %v637
        %v922 = vunpack.c.l.b16 %v638
        %v923 = vunpack.c.h.b16 %v638
        %v924 = vunpack.c.l.b16 %v639
        %v925 = vunpack.c.l.b16 %v640
        %v926 = vunpack.c.h.b16 %v640
        %v927 = vunpack.c.l.b16 %v641
        %v928 = vunpack.c.l.b16 %v642
        %v929 = vunpack.c.h.b16 %v642
        %v930 = vunpack.c.l.b16 %v643
        %v931 = vunpack.c.l.b16 %v644
        %v932 = vunpack.c.h.b16 %v644
        %v933 = vunpack.c.l.b16 %v645
        %v934 = vunpack.c.l.b16 %v646
        %v935 = vunpack.c.h.b16 %v646
        %v936 = vunpack.c.l.b16 %v647
        %v937 = vunpack.c.l.b16 %v648
        %v938 = vunpack.c.h.b16 %v648
        %v939 = vunpack.c.l.b16 %v649
        %v940 = vunpack.c.l.b16 %v650
        %v941 = vunpack.c.h.b16 %v650
        %v942 = vunpack.c.l.b16 %v651
        %v943 = vunpack.c.l.b16 %v652
        %v944 = vunpack.c.h.b16 %v652
        %v945 = vunpack.c.l.b16 %v653
        %v946 = vunpack.c.l.b16 %v654
        %v947 = vunpack.c.h.b16 %v654
        %v948 = vunpack.c.l.b16 %v655
        %v949 = vunpack.c.l.b16 %v656
        %v950 = vunpack.c.h.b16 %v656
        %v951 = vunpack.c.l.b16 %v657
        %v952 = vunpack.c.l.b16 %v658
        %v953 = vunpack.c.h.b16 %v658
        %v954 = vunpack.c.l.b16 %v659
        %v955 = vunpack.c.l.b16 %v660
        %v956 = vunpack.c.h.b16 %v660
        %v957 = vunpack.c.l.b16 %v661
        %v958 = vunpack.c.l.b16 %v662
        %v959 = vunpack.c.h.b16 %v662
        %v960 = vunpack.c.l.b16 %v663
        %v961 = vunpack.c.l.b16 %v664
        %v962 = vunpack.c.h.b16 %v664
        %v963 = vunpack.c.l.b16 %v665
        %v964 = vunpack.c.l.b16 %v666
        %v965 = vunpack.c.h.b16 %v666
        %v966 = vunpack.c.l.b16 %v667
        %v967 = vunpack.c.l.b16 %v668
        %v968 = vunpack.c.h.b16 %v668
        %v969 = vunpack.c.l.b16 %v669
        %v970 = vunpack.c.l.b16 %v670
        %v971 = vunpack.c.h.b16 %v670
        %v972 = vunpack.c.l.b16 %v671
        %v973 = vunpack.c.l.b16 %v672
        %v974 = vunpack.c.h.b16 %v672
        %v975 = vunpack.c.l.b16 %v673
        %v976 = vunpack.c.l.b16 %v674
        %v977 = vunpack.c.h.b16 %v674
        %v978 = vunpack.c.l.b16 %v675
        %v979 = vunpack.c.l.b16 %v676
        %v980 = vunpack.c.h.b16 %v676
        %v981 = vunpack.c.l.b16 %v677
        %v982 = vunpack.c.l.b16 %v678
        %v983 = vunpack.c.h.b16 %v678
        %v984 = vunpack.c.l.b16 %v679
        %v985 = vunpack.c.l.b16 %v680
        %v986 = vunpack.c.h.b16 %v680
        %v987 = vunpack.c.l.b16 %v681
        %v988 = vunpack.c.l.b16 %v682
        %v989 = vunpack.c.h.b16 %v682
        %v990 = vunpack.c.l.b16 %v683
        %v991 = vunpack.c.l.b16 %v684
        %v992 = vunpack.c.h.b16 %v684
        %v993 = vunpack.c.l.b16 %v685
        %v994 = vunpack.c.l.b16 %v686
        %v995 = vunpack.c.h.b16 %v686
        %v996 = vunpack.c.l.b16 %v687
        %v997 = vunpack.c.l.b16 %v688
        %v998 = vunpack.c.h.b16 %v688
        %v999 = vunpack.c.l.b16 %v689
        %v1000 = vunpack.c.l.b16 %v690
        %v1001 = vunpack.c.h.b16 %v690
        %v1002 = vunpack.c.l.b16 %v691
        %v1003 = vunpack.c.l.b16 %v692
        %v1004 = vunpack.c.h.b16 %v692
        %v1005 = vunpack.c.l.b16 %v693
        %v1006 = vunpack.c.l.b16 %v694
        %v1007 = vunpack.c.h.b16 %v694
        %v1008 = vunpack.c.l.b16 %v695
        %v1009 = vunpack.c.l.b16 %v696
        %v1010 = vunpack.c.h.b16 %v696
        %v1011 = vunpack.c.l.b16 %v697
        %v1012 = vunpack.c.l.b16 %v698
        %v1013 = vunpack.c.h.b16 %v698
        %v1014 = vunpack.c.l.b16 %v699
        %v1015 = vunpack.c.l.b16 %v700
        %v1016 = vunpack.c.h.b16 %v700
        %v1017 = vunpack.c.l.b16 %v701
        %v1018 = vunpack.c.l.b16 %v702
        %v1019 = vunpack.c.h.b16 %v702
        %v1020 = vunpack.c.l.b16 %v703
        %v1021 = vunpack.c.l.b16 %v704
        %v1022 = vunpack.c.h.b16 %v704
        %v1023 = vunpack.c.l.b16 %v705
        %v1024 = vunpack.c.l.b16 %v706
        %v1025 = vunpack.c.h.b16 %v706
        %v1026 = vunpack.c.l.b16 %v707
        %v1027 = vunpack.c.l.b16 %v708
        %v1028 = vunpack.c.h.b16 %v708
        %v1029 = vunpack.c.l.b16 %v709
        %v1030 = vunpack.c.l.b16 %v710
        %v1031 = vunpack.c.h.b16 %v710
        %v1032 = vunpack.c.l.b16 %v711
        %v1033 = vunpack.c.l.b16 %v712
        %v1034 = vunpack.c.h.b16 %v712
        %v1035 = vunpack.c.l.b16 %v713
        %v1036 = vunpack.c.l.b16 %v714
        %v1037 = vunpack.c.h.b16 %v714
        %v1038 = vunpack.c.l.b16 %v715
        %v1039 = vunpack.c.l.b16 %v716
        %v1040 = vunpack.c.h.b16 %v716
        %v1041 = vunpack.c.l.b16 %v717
        %v1042 = vunpack.c.l.b16 %v718
        %v1043 = vunpack.c.h.b16 %v718
        %v1044 = vunpack.c.l.b16 %v719
        %v1045 = vunpack.c.l.b16 %v720
        %v1046 = vunpack.c.h.b16 %v720
        %v1047 = vunpack.c.l.b16 %v721
        %v1048 = vunpack.c.l.b16 %v722
        %v1049 = vunpack.c.h.b16 %v722
        %v1050 = vunpack.c.l.b16 %v723
        %v1051 = vunpack.c.l.b16 %v724
        %v1052 = vunpack.c.h.b16 %v724
        %v1053 = vunpack.c.l.b16 %v725
        %v1054 = vpack.c.b16 %v865, %v862
        %v1055 = vpack.c.b16 %v866, %v863
        %v1056 = vpack.c.b16 %v867, %v864
        %v1057 = vpack.c.b16 %v871, %v868
        %v1058 = vpack.c.b16 %v872, %v869
        %v1059 = vpack.c.b16 %v873, %v870
        %v1060 = vpack.c.b16 %v877, %v874
        %v1061 = vpack.c.b16 %v878, %v875
        %v1062 = vpack.c.b16 %v879, %v876
        %v1063 = vpack.c.b16 %v883, %v880
        %v1064 = vpack.c.b16 %v884, %v881
        %v1065 = vpack.c.b16 %v885, %v882
        %v1066 = vpack.c.b16 %v889, %v886
        %v1067 = vpack.c.b16 %v890, %v887
        %v1068 = vpack.c.b16 %v891, %v888
        %v1069 = vpack.c.b16 %v895, %v892
        %v1070 = vpack.c.b16 %v896, %v893
        %v1071 = vpack.c.b16 %v897, %v894
        %v1072 = vpack.c.b16 %v901, %v898
        %v1073 = vpack.c.b16 %v902, %v899
        %v1074 = vpack.c.b16 %v903, %v900
        %v1075 = vpack.c.b16 %v907, %v904
        %v1076 = vpack.c.b16 %v908, %v905
        %v1077 = vpack.c.b16 %v909, %v906
        %v1078 = vpack.c.b16 %v913, %v910
        %v1079 = vpack.c.b16 %v914, %v911
        %v1080 = vpack.c.b16 %v915, %v912
        %v1081 = vpack.c.b16 %v919, %v916
        %v1082 = vpack.c.b16 %v920, %v917
        %v1083 = vpack.c.b16 %v921, %v918
        %v1084 = vpack.c.b16 %v925, %v922
        %v1085 = vpack.c.b16 %v926, %v923
        %v1086 = vpack.c.b16 %v927, %v924
        %v1087 = vpack.c.b16 %v931, %v928
        %v1088 = vpack.c.b16 %v932, %v929
        %v1089 = vpack.c.b16 %v933, %v930
        %v1090 = vpack.c.b16 %v937, %v934
        %v1091 = vpack.c.b16 %v938, %v935
        %v1092 = vpack.c.b16 %v939, %v936
        %v1093 = vpack.c.b16 %v943, %v940
        %v1094 = vpack.c.b16 %v944, %v941
        %v1095 = vpack.c.b16 %v945, %v942
        %v1096 = vpack.c.b16 %v949, %v946
        %v1097 = vpack.c.b16 %v950, %v947
        %v1098 = vpack.c.b16 %v951, %v948
        %v1099 = vpack.c.b16 %v955, %v952
        %v1100 = vpack.c.b16 %v956, %v953
        %v1101 = vpack.c.b16 %v957, %v954
        %v1102 = vpack.c.b16 %v961, %v958
        %v1103 = vpack.c.b16 %v962, %v959
        %v1104 = vpack.c.b16 %v963, %v960
        %v1105 = vpack.c.b16 %v967, %v964
        %v1106 = vpack.c.b16 %v968, %v965
        %v1107 = vpack.c.b16 %v969, %v966
        %v1108 = vpack.c.b16 %v973, %v970
        %v1109 = vpack.c.b16 %v974, %v971
        %v1110 = vpack.c.b16 %v975, %v972
        %v1111 = vpack.c.b16 %v979, %v976
        %v1112 = vpack.c.b16 %v980, %v977
        %v1113 = vpack.c.b16 %v981, %v978
        %v1114 = vpack.c.b16 %v985, %v982
        %v1115 = vpack.c.b16 %v986, %v983
        %v1116 = vpack.c.b16 %v987, %v984
        %v1117 = vpack.c.b16 %v991, %v988
        %v1118 = vpack.c.b16 %v992, %v989
        %v1119 = vpack.c.b16 %v993, %v990
        %v1120 = vpack.c.b16 %v997, %v994
        %v1121 = vpack.c.b16 %v998, %v995
        %v1122 = vpack.c.b16 %v999, %v996
        %v1123 = vpack.c.b16 %v1003, %v1000
        %v1124 = vpack.c.b16 %v1004, %v1001
        %v1125 = vpack.c.b16 %v1005, %v1002
        %v1126 = vpack.c.b16 %v1009, %v1006
        %v1127 = vpack.c.b16 %v1010, %v1007
        %v1128 = vpack.c.b16 %v1011, %v1008
        %v1129 = vpack.c.b16 %v1015, %v1012
        %v1130 = vpack.c.b16 %v1016, %v1013
        %v1131 = vpack.c.b16 %v1017, %v1014
        %v1132 = vpack.c.b16 %v1021, %v1018
        %v1133 = vpack.c.b16 %v1022, %v1019
        %v1134 = vpack.c.b16 %v1023, %v1020
        %v1135 = vpack.c.b16 %v1027, %v1024
        %v1136 = vpack.c.b16 %v1028, %v1025
        %v1137 = vpack.c.b16 %v1029, %v1026
        %v1138 = vpack.c.b16 %v1033, %v1030
        %v1139 = vpack.c.b16 %v1034, %v1031
        %v1140 = vpack.c.b16 %v1035, %v1032
        %v1141 = vpack.c.b16 %v1039, %v1036
        %v1142 = vpack.c.b16 %v1040, %v1037
        %v1143 = vpack.c.b16 %v1041, %v1038
        %v1144 = vpack.c.b16 %v1045, %v1042
        %v1145 = vpack.c.b16 %v1046, %v1043
        %v1146 = vpack.c.b16 %v1047, %v1044
        %v1147 = vpack.c.b16 %v1051, %v1048
        %v1148 = vpack.c.b16 %v1052, %v1049
        %v1149 = vpack.c.b16 %v1053, %v1050
        %1246 = vmatpush.bf16.msra.mxu0 %v1075
        %1247 = vmatpush.bf16.msra.mxu0 %v1072
        %1248 = vmatpush.bf16.msra.mxu0 %v1069
        %1249 = vmatpush.bf16.msra.mxu0 %v1066
        %1250 = vmatpush.bf16.msra.mxu0 %v1063
        %1251 = vmatpush.bf16.msra.mxu0 %v1060
        %1252 = vmatpush.bf16.msra.mxu0 %v1057
        %1253 = vmatpush.bf16.msra.mxu0 %v1054
        %1254 = vmatmul.bf16.gmra.mxu0 %v594
        %v1255 = vpop.f32.mrf.mxu0
        %v1256 = vadd.f32 %v728, %v1255
        %v1257 = vpop.f32.mrf.mxu0
        %1258 = vdwg.mxu0
        %1259 = vmatpush.bf16.msra.mxu0 %v1099
        %1260 = vmatpush.bf16.msra.mxu0 %v1096
        %1261 = vmatpush.bf16.msra.mxu0 %v1093
        %1262 = vmatpush.bf16.msra.mxu0 %v1090
        %1263 = vmatpush.bf16.msra.mxu0 %v1087
        %1264 = vmatpush.bf16.msra.mxu0 %v1084
        %1265 = vmatpush.bf16.msra.mxu0 %v1081
        %1266 = vmatpush.bf16.msra.mxu0 %v1078
        %1267 = vmatmul.bf16.gmra.mxu0 %v595
        %v1268 = vpop.f32.mrf.mxu0
        %v1269 = vadd.f32 %v1256, %v1268
        %v1270 = vpop.f32.mrf.mxu0
        %1271 = vdwg.mxu0
        %1272 = vmatpush.bf16.msra.mxu0 %v1123
        %1273 = vmatpush.bf16.msra.mxu0 %v1120
        %1274 = vmatpush.bf16.msra.mxu0 %v1117
        %1275 = vmatpush.bf16.msra.mxu0 %v1114
        %1276 = vmatpush.bf16.msra.mxu0 %v1111
        %1277 = vmatpush.bf16.msra.mxu0 %v1108
        %1278 = vmatpush.bf16.msra.mxu0 %v1105
        %1279 = vmatpush.bf16.msra.mxu0 %v1102
        %1280 = vmatmul.bf16.gmra.mxu0 %v596
        %v1281 = vpop.f32.mrf.mxu0
        %v1282 = vadd.f32 %v1269, %v1281
        %v1283 = vpop.f32.mrf.mxu0
        %1284 = vdwg.mxu0
        %1285 = vmatpush.bf16.msra.mxu0 %v1147
        %1286 = vmatpush.bf16.msra.mxu0 %v1144
        %1287 = vmatpush.bf16.msra.mxu0 %v1141
        %1288 = vmatpush.bf16.msra.mxu0 %v1138
        %1289 = vmatpush.bf16.msra.mxu0 %v1135
        %1290 = vmatpush.bf16.msra.mxu0 %v1132
        %1291 = vmatpush.bf16.msra.mxu0 %v1129
        %1292 = vmatpush.bf16.msra.mxu0 %v1126
        %1293 = vmatmul.bf16.gmra.mxu0 %v597
        %v1294 = vpop.f32.mrf.mxu0
        %v1295 = vadd.f32 %v1282, %v1294
        %v1296 = vpop.f32.mrf.mxu0
        %1297 = vdwg.mxu0
        %1298 = vmatpush.bf16.msra.mxu0 %v1076
        %1299 = vmatpush.bf16.msra.mxu0 %v1073
        %1300 = vmatpush.bf16.msra.mxu0 %v1070
        %1301 = vmatpush.bf16.msra.mxu0 %v1067
        %1302 = vmatpush.bf16.msra.mxu0 %v1064
        %1303 = vmatpush.bf16.msra.mxu0 %v1061
        %1304 = vmatpush.bf16.msra.mxu0 %v1058
        %1305 = vmatpush.bf16.msra.mxu0 %v1055
        %1306 = vmatmul.bf16.gmra.mxu0 %v594
        %v1307 = vpop.f32.mrf.mxu0
        %v1308 = vadd.f32 %v729, %v1307
        %v1309 = vpop.f32.mrf.mxu0
        %1310 = vdwg.mxu0
        %1311 = vmatpush.bf16.msra.mxu0 %v1100
        %1312 = vmatpush.bf16.msra.mxu0 %v1097
        %1313 = vmatpush.bf16.msra.mxu0 %v1094
        %1314 = vmatpush.bf16.msra.mxu0 %v1091
        %1315 = vmatpush.bf16.msra.mxu0 %v1088
        %1316 = vmatpush.bf16.msra.mxu0 %v1085
        %1317 = vmatpush.bf16.msra.mxu0 %v1082
        %1318 = vmatpush.bf16.msra.mxu0 %v1079
        %1319 = vmatmul.bf16.gmra.mxu0 %v595
        %v1320 = vpop.f32.mrf.mxu0
        %v1321 = vadd.f32 %v1308, %v1320
        %v1322 = vpop.f32.mrf.mxu0
        %1323 = vdwg.mxu0
        %1324 = vmatpush.bf16.msra.mxu0 %v1124
        %1325 = vmatpush.bf16.msra.mxu0 %v1121
        %1326 = vmatpush.bf16.msra.mxu0 %v1118
        %1327 = vmatpush.bf16.msra.mxu0 %v1115
        %1328 = vmatpush.bf16.msra.mxu0 %v1112
        %1329 = vmatpush.bf16.msra.mxu0 %v1109
        %1330 = vmatpush.bf16.msra.mxu0 %v1106
        %1331 = vmatpush.bf16.msra.mxu0 %v1103
        %1332 = vmatmul.bf16.gmra.mxu0 %v596
        %v1333 = vpop.f32.mrf.mxu0
        %v1334 = vadd.f32 %v1321, %v1333
        %v1335 = vpop.f32.mrf.mxu0
        %1336 = vdwg.mxu0
        %1337 = vmatpush.bf16.msra.mxu0 %v1148
        %1338 = vmatpush.bf16.msra.mxu0 %v1145
        %1339 = vmatpush.bf16.msra.mxu0 %v1142
        %1340 = vmatpush.bf16.msra.mxu0 %v1139
        %1341 = vmatpush.bf16.msra.mxu0 %v1136
        %1342 = vmatpush.bf16.msra.mxu0 %v1133
        %1343 = vmatpush.bf16.msra.mxu0 %v1130
        %1344 = vmatpush.bf16.msra.mxu0 %v1127
        %1345 = vmatmul.bf16.gmra.mxu0 %v597
        %v1346 = vpop.f32.mrf.mxu0
        %v1347 = vadd.f32 %v1334, %v1346
        %v1348 = vpop.f32.mrf.mxu0
        %1349 = vdwg.mxu0
        %1350 = vmatpush.bf16.msra.mxu0 %v1077
        %1351 = vmatpush.bf16.msra.mxu0 %v1074
        %1352 = vmatpush.bf16.msra.mxu0 %v1071
        %1353 = vmatpush.bf16.msra.mxu0 %v1068
        %1354 = vmatpush.bf16.msra.mxu0 %v1065
        %1355 = vmatpush.bf16.msra.mxu0 %v1062
        %1356 = vmatpush.bf16.msra.mxu0 %v1059
        %1357 = vmatpush.bf16.msra.mxu0 %v1056
        %1358 = vmatmul.bf16.gmra.mxu0 %v594
        %v1359 = vpop.f32.mrf.mxu0
        %v1360 = vadd.f32 %v730, %v1359
        %v1361 = vpop.f32.mrf.mxu0
        %1362 = vdwg.mxu0
        %1363 = vmatpush.bf16.msra.mxu0 %v1101
        %1364 = vmatpush.bf16.msra.mxu0 %v1098
        %1365 = vmatpush.bf16.msra.mxu0 %v1095
        %1366 = vmatpush.bf16.msra.mxu0 %v1092
        %1367 = vmatpush.bf16.msra.mxu0 %v1089
        %1368 = vmatpush.bf16.msra.mxu0 %v1086
        %1369 = vmatpush.bf16.msra.mxu0 %v1083
        %1370 = vmatpush.bf16.msra.mxu0 %v1080
        %1371 = vmatmul.bf16.gmra.mxu0 %v595
        %v1372 = vpop.f32.mrf.mxu0
        %v1373 = vadd.f32 %v1360, %v1372
        %v1374 = vpop.f32.mrf.mxu0
        %1375 = vdwg.mxu0
        %1376 = vmatpush.bf16.msra.mxu0 %v1125
        %1377 = vmatpush.bf16.msra.mxu0 %v1122
        %1378 = vmatpush.bf16.msra.mxu0 %v1119
        %1379 = vmatpush.bf16.msra.mxu0 %v1116
        %1380 = vmatpush.bf16.msra.mxu0 %v1113
        %1381 = vmatpush.bf16.msra.mxu0 %v1110
        %1382 = vmatpush.bf16.msra.mxu0 %v1107
        %1383 = vmatpush.bf16.msra.mxu0 %v1104
        %1384 = vmatmul.bf16.gmra.mxu0 %v596
        %v1385 = vpop.f32.mrf.mxu0
        %v1386 = vadd.f32 %v1373, %v1385
        %v1387 = vpop.f32.mrf.mxu0
        %1388 = vdwg.mxu0
        %1389 = vmatpush.bf16.msra.mxu0 %v1149
        %1390 = vmatpush.bf16.msra.mxu0 %v1146
        %1391 = vmatpush.bf16.msra.mxu0 %v1143
        %1392 = vmatpush.bf16.msra.mxu0 %v1140
        %1393 = vmatpush.bf16.msra.mxu0 %v1137
        %1394 = vmatpush.bf16.msra.mxu0 %v1134
        %1395 = vmatpush.bf16.msra.mxu0 %v1131
        %1396 = vmatpush.bf16.msra.mxu0 %v1128
        %1397 = vmatmul.bf16.gmra.mxu0 %v597
        %v1398 = vpop.f32.mrf.mxu0
        %v1399 = vadd.f32 %v1386, %v1398
        %v1400 = vpop.f32.mrf.mxu0
        %1401 = vdwg.mxu0
        %v1402 = vmax.f32 %v1295, 0.0
        %v1403 = vmax.f32 %v1347, 0.0
        %v1404 = vmax.f32 %v1399, 0.0
        %v1405 = vld [vmem:[#allocation8] sm:$0x7]
        %v1407 = vperm.slane %v1405, 0
        %v1408 = vperm.slane %v1405, 1
        %v1409 = vperm.slane %v1405, 2
        %v1413 = vmul.f32 %v1402, %v1407
        %v1414 = vmul.f32 %v1403, %v1408
        %v1415 = vmul.f32 %v1404, %v1409
        %v1416 = vadd.f32 %v1413, %v1414
        %v1417 = vadd.f32 %v1416, %v1415
        %1418 = vadd.xlane.f32.xlu0 %v1417
        %v1419 = vpop.xlane.xlu0 %1418
        %v1420 = vld [vmem:[#allocation2] sm:$0x1]
        %v1422 = vperm.slane %v1420, 0
        %v1424 = vadd.f32 %v1419, %v1422
        %vm1425 = vcmask 7168
        %1426 = vst.msk [vmem:[%s409] sm:$0xff] %vm1425, %v1424
        %p1427 = scmp.lt.s32.totalorder %s25, 1
        %s1428 = scalar_select %p1427, %s25, 1
        %s1429 = smul.addr %s1428, 8
        %s1430 = scalar_lea.vmem %s9, %s1429
        // Predicated region
        $region73: #{tpu_custom_call.1} parent=55 // pred_check
          %p1431 = pneg %p242
        $region74: #{tpu_custom_call.1} parent=55 // pred_check_branch
          %1433 = sbr.rel (%p1431) target = $region76
        $region75: #{tpu_custom_call.1} parent=55 // pred_region
          _
        $region76: #{tpu_custom_call.1} parent=55 // pred_fallthru
          _
      $region56: #{tpu_custom_call.1} parent=5 // pred_fallthru
        _
      %p1434 = scmp.le.s32.totalorder 2, %s20
      // Predicated region
      $region77: #{tpu_custom_call.1} parent=5 // pred_check
        %p1435 = pneg %p1434
      $region78: #{tpu_custom_call.1} parent=5 // pred_check_branch
        %1437 = sbr.rel (%p1435) target = $region80
      $region79: #{tpu_custom_call.1} parent=5 // pred_region
        %s1438 = ssub.s32 %s20, 2
        // Predicated region
        $region81: #{tpu_custom_call.1} parent=79 // pred_check
          %p1439 = pneg %p248
        $region82: #{tpu_custom_call.1} parent=79 // pred_check_branch
          %1441 = sbr.rel (%p1439) target = $region84
        $region83: #{tpu_custom_call.1} parent=79 // pred_region
          %p1442 = scmp.lt.s32.totalorder %s26, 1
          %s1443 = scalar_select %p1442, %s26, 1
          %s1444 = smul.addr %s1443, 8
          %s1445 = scalar_lea.vmem %s9, %s1444
        $region84: #{tpu_custom_call.1} parent=79 // pred_fallthru
          _
      $region80: #{tpu_custom_call.1} parent=5 // pred_fallthru
        _
    $region6: #{tpu_custom_call.1} parent=1 // loop_footer
      %s24 = sadd.s32 1, %s20
    $region7: #{tpu_custom_call.1} parent=1 // loop_footer_branch
      %19 = sbr.rel target = $region3
    $region8: #{tpu_custom_call.1} parent=1 // loop_exit
      _
    %1446 = vsyncpa [#allocation4], 1
    %s1447 = scalar_lea.sflag [#allocation4], 1
    %1448 = vsyncpa %s1447, 1
    %1449 = vsyncpa [#allocation6], 1
    %1450 = vsyncpa [#allocation9], 1

</llo_original>
